<compile_context>
chip_gen: v7x
topology: tpu7x:2x2x1
jax: 0.10.0
libtpu: 0.0.40
codegen_flags: <defaults>
</compile_context>

<pallas_src>
import jax
import jax.numpy as jnp
from jax import lax
from jax.experimental import pallas as pl
from jax.experimental.pallas import tpu as pltpu

EPS = 1e-5


def _make_resblock_kernel(cin, ch, cout, count, add_residual):
    inv_count = 1.0 / float(count)

    def conv1x1(w, x, k):
        # w: (co, k), x: (N, k, HW) -> (N, co, HW)
        # K in {4, 8}: too small for the MXU; unrolled VPU MAC chain instead.
        acc = w[:, 0:1][None, :, :] * x[:, 0:1, :]
        for i in range(1, k):
            acc = acc + w[:, i:i + 1][None, :, :] * x[:, i:i + 1, :]
        return acc

    def bn_fold(h, g, be):
        # Training-mode BatchNorm folded into a per-channel scale/shift.
        # One-pass stats: var = E[h^2] - E[h]^2 (biased), clamped at 0.
        s1 = jnp.sum(jnp.sum(h, axis=-1, keepdims=True), axis=0, keepdims=True)
        s2 = jnp.sum(jnp.sum(h * h, axis=-1, keepdims=True), axis=0,
                     keepdims=True)
        m = s1 * inv_count
        v = jnp.maximum(s2 * inv_count - m * m, 0.0)
        scale = g[None, :, :] * lax.rsqrt(v + EPS)     # (1, C, 1)
        shift = be[None, :, :] - m * scale             # (1, C, 1)
        return h * scale + shift                       # 2 big broadcast ops

    def kernel(x_ref, p_ref, o_ref):
        x = x_ref[...]                                 # (N, cin, HW)

        c0 = cin + ch
        w1 = p_ref[0:ch, 0:cin]                        # (ch, cin)
        w2 = p_ref[0:cout, cin:c0]                     # (cout, ch)
        g1 = p_ref[0:ch, c0 + 0:c0 + 1]                # (ch, 1)
        be1 = p_ref[0:ch, c0 + 1:c0 + 2]
        g2 = p_ref[0:cout, c0 + 2:c0 + 3]              # (cout, 1)
        be2 = p_ref[0:cout, c0 + 3:c0 + 4]

        # conv1 (1x1, bias dropped: cancelled by BN mean) -> bn1 -> relu
        h = conv1x1(w1, x, cin)
        h = jnp.maximum(bn_fold(h, g1, be1), 0.0)

        # conv2 (1x1) -> bn2
        o = conv1x1(w2, h, ch)
        o = bn_fold(o, g2, be2)

        # residual add (shape equality resolved statically in the wrapper)
        if add_residual:
            o = o + x

        # final relu
        o_ref[...] = jnp.maximum(o, 0.0)

    return kernel


def resblock_forward(x, params):
    """x: NCHW float32. params: (w1, b1, g1, be1, w2, b2, g2, be2)."""
    w1, b1, g1, be1, w2, b2, g2, be2 = params
    del b1, b2  # exactly cancelled by training-mode BN mean subtraction
    N, Cin, H, W = x.shape
    Ch = w1.shape[0]
    Cout = w2.shape[0]
    HW = H * W

    # NCHW -> (N, C, HW): merges trailing row-major dims only => free reshape.
    x_flat = x.reshape(N, Cin, HW)

    # residual = x.squeeze(); PyTorch adds it iff out.shape == residual.shape,
    # which is a static property of the shapes here.
    residual_shape = tuple(d for d in x.shape if d != 1)
    add_residual = (N, Cout, H, W) == residual_shape

    # Pack all per-channel params into one small array (single DMA):
    #   cols [0, Cin)              -> w1   (rows [0, Ch))
    #   cols [Cin, Cin+Ch)         -> w2   (rows [0, Cout))
    #   cols Cin+Ch .. Cin+Ch+3    -> g1, be1, g2, be2
    maxr = max(Ch, Cout)
    ncol = Cin + Ch + 4
    packed = jnp.zeros((maxr, ncol), jnp.float32)
    packed = packed.at[:Ch, 0:Cin].set(w1)
    packed = packed.at[:Cout, Cin:Cin + Ch].set(w2)
    packed = packed.at[:Ch, Cin + Ch + 0].set(g1)
    packed = packed.at[:Ch, Cin + Ch + 1].set(be1)
    packed = packed.at[:Cout, Cin + Ch + 2].set(g2)
    packed = packed.at[:Cout, Cin + Ch + 3].set(be2)

    kernel = _make_resblock_kernel(Cin, Ch, Cout, N * HW, add_residual)

    out_flat = pl.pallas_call(
        kernel,
        out_shape=jax.ShapeDtypeStruct((N, Cout, HW), jnp.float32),
        in_specs=[pl.BlockSpec(memory_space=pltpu.MemorySpace.VMEM)] * 2,
        out_specs=pl.BlockSpec(memory_space=pltpu.MemorySpace.VMEM),
    )(x_flat, packed)

    # (N, C, HW) -> NCHW: split of trailing dim only => free reshape.
    return out_flat.reshape(N, Cout, H, W)


def ref_forward(x, params):
    """Pure-JAX reference matching the PyTorch forward (training-mode BN)."""
    w1, b1, g1, be1, w2, b2, g2, be2 = params

    def conv1x1(t, w, b):
        return jnp.einsum('nchw,oc->nohw', t, w) + b[None, :, None, None]

    def bn(t, g, be):
        m = t.mean(axis=(0, 2, 3), keepdims=True)
        v = jnp.mean((t - m) ** 2, axis=(0, 2, 3), keepdims=True)
        return (t - m) / jnp.sqrt(v + EPS) * g[None, :, None, None] \
            + be[None, :, None, None]

    residual = jnp.squeeze(x)
    out = jax.nn.relu(bn(conv1x1(x, w1, b1), g1, be1))
    out = bn(conv1x1(out, w2, b2), g2, be2)
    if out.shape == residual.shape:
        out = out + residual
    return jax.nn.relu(out)


def init_params(key, in_dims, h_dims, out_dims):
    k1, k2, k3, k4 = jax.random.split(key, 4)
    w1 = jax.random.normal(k1, (h_dims, in_dims), jnp.float32) * 0.5
    b1 = jax.random.normal(k2, (h_dims,), jnp.float32) * 0.1
    w2 = jax.random.normal(k3, (out_dims, h_dims), jnp.float32) * 0.5
    b2 = jax.random.normal(k4, (out_dims,), jnp.float32) * 0.1
    # BatchNorm2d defaults: gamma = 1, beta = 0
    g1 = jnp.ones((h_dims,), jnp.float32)
    be1 = jnp.zeros((h_dims,), jnp.float32)
    g2 = jnp.ones((out_dims,), jnp.float32)
    be2 = jnp.zeros((out_dims,), jnp.float32)
    return (w1, b1, g1, be1, w2, b2, g2, be2)


if __name__ == "__main__":
    # ResBlock(in_dims=4, h_dims=8, out_dims=4) on x of shape (2, 4, 16, 16)
    N, Cin, H, W = 2, 4, 16, 16
    h_dims, out_dims = 8, 4

    key = jax.random.PRNGKey(0)
    kx, kp = jax.random.split(key)
    x = jax.random.normal(kx, (N, Cin, H, W), jnp.float32)
    params = init_params(kp, Cin, h_dims, out_dims)

    out = resblock_forward(x, params)
    out = jax.block_until_ready(out)

    ref = ref_forward(x, params)
    assert out.shape == ref.shape
    assert jnp.allclose(out, ref, rtol=1e-4, atol=1e-4), \
        f"max abs diff = {jnp.max(jnp.abs(out - ref))}"

    print("KERNEL_OK")
</pallas_src>

<mosaic_0001>
module attributes {stable_mosaic.version = 11 : i64} {
  func.func @kernel(%arg0: memref<2x4x256xf32, #tpu.memory_space<vmem>>, %arg1: memref<8x16xf32, #tpu.memory_space<vmem>>, %arg2: memref<2x4x256xf32, #tpu.memory_space<vmem>>) attributes {dimension_semantics = [], scalar_prefetch = 0 : i64, scratch_operands = 0 : i64, tpu.core_type = #tpu.core_type<tc>} {
    %c0 = arith.constant 0 : index
    %c0_0 = arith.constant 0 : index
    %c0_1 = arith.constant 0 : index
    %0 = vector.load %arg0[%c0, %c0_0, %c0_1] : memref<2x4x256xf32, #tpu.memory_space<vmem>>, vector<2x4x256xf32>
    %c0_2 = arith.constant 0 : index
    %c0_3 = arith.constant 0 : index
    %1 = vector.load %arg1[%c0_2, %c0_3] : memref<8x16xf32, #tpu.memory_space<vmem>>, vector<8x4xf32>
    %c0_4 = arith.constant 0 : index
    %c4 = arith.constant 4 : index
    %2 = vector.load %arg1[%c0_4, %c4] : memref<8x16xf32, #tpu.memory_space<vmem>>, vector<4x8xf32>
    %c0_5 = arith.constant 0 : index
    %c12 = arith.constant 12 : index
    %3 = vector.load %arg1[%c0_5, %c12] : memref<8x16xf32, #tpu.memory_space<vmem>>, vector<8x1xf32>
    %c0_6 = arith.constant 0 : index
    %c13 = arith.constant 13 : index
    %4 = vector.load %arg1[%c0_6, %c13] : memref<8x16xf32, #tpu.memory_space<vmem>>, vector<8x1xf32>
    %c0_7 = arith.constant 0 : index
    %c14 = arith.constant 14 : index
    %5 = vector.load %arg1[%c0_7, %c14] : memref<8x16xf32, #tpu.memory_space<vmem>>, vector<4x1xf32>
    %c0_8 = arith.constant 0 : index
    %c15 = arith.constant 15 : index
    %6 = vector.load %arg1[%c0_8, %c15] : memref<8x16xf32, #tpu.memory_space<vmem>>, vector<4x1xf32>
    %7 = vector.extract_strided_slice %1 {offsets = [0, 0], sizes = [8, 1], strides = [1, 1]} : vector<8x4xf32> to vector<8x1xf32>
    %8 = vector.shape_cast %7 : vector<8x1xf32> to vector<1x8x1xf32>
    %9 = vector.extract_strided_slice %0 {offsets = [0, 0, 0], sizes = [2, 1, 256], strides = [1, 1, 1]} : vector<2x4x256xf32> to vector<2x1x256xf32>
    %10 = vector.broadcast %8 : vector<1x8x1xf32> to vector<2x8x256xf32>
    %11 = vector.broadcast %9 : vector<2x1x256xf32> to vector<2x8x256xf32>
    %12 = arith.mulf %10, %11 : vector<2x8x256xf32>
    %13 = vector.extract_strided_slice %1 {offsets = [0, 1], sizes = [8, 1], strides = [1, 1]} : vector<8x4xf32> to vector<8x1xf32>
    %14 = vector.shape_cast %13 : vector<8x1xf32> to vector<1x8x1xf32>
    %15 = vector.extract_strided_slice %0 {offsets = [0, 1, 0], sizes = [2, 1, 256], strides = [1, 1, 1]} : vector<2x4x256xf32> to vector<2x1x256xf32>
    %16 = vector.broadcast %14 : vector<1x8x1xf32> to vector<2x8x256xf32>
    %17 = vector.broadcast %15 : vector<2x1x256xf32> to vector<2x8x256xf32>
    %18 = arith.mulf %16, %17 : vector<2x8x256xf32>
    %19 = arith.addf %12, %18 : vector<2x8x256xf32>
    %20 = vector.extract_strided_slice %1 {offsets = [0, 2], sizes = [8, 1], strides = [1, 1]} : vector<8x4xf32> to vector<8x1xf32>
    %21 = vector.shape_cast %20 : vector<8x1xf32> to vector<1x8x1xf32>
    %22 = vector.extract_strided_slice %0 {offsets = [0, 2, 0], sizes = [2, 1, 256], strides = [1, 1, 1]} : vector<2x4x256xf32> to vector<2x1x256xf32>
    %23 = vector.broadcast %21 : vector<1x8x1xf32> to vector<2x8x256xf32>
    %24 = vector.broadcast %22 : vector<2x1x256xf32> to vector<2x8x256xf32>
    %25 = arith.mulf %23, %24 : vector<2x8x256xf32>
    %26 = arith.addf %19, %25 : vector<2x8x256xf32>
    %27 = vector.extract_strided_slice %1 {offsets = [0, 3], sizes = [8, 1], strides = [1, 1]} : vector<8x4xf32> to vector<8x1xf32>
    %28 = vector.shape_cast %27 : vector<8x1xf32> to vector<1x8x1xf32>
    %29 = vector.extract_strided_slice %0 {offsets = [0, 3, 0], sizes = [2, 1, 256], strides = [1, 1, 1]} : vector<2x4x256xf32> to vector<2x1x256xf32>
    %30 = vector.broadcast %28 : vector<1x8x1xf32> to vector<2x8x256xf32>
    %31 = vector.broadcast %29 : vector<2x1x256xf32> to vector<2x8x256xf32>
    %32 = arith.mulf %30, %31 : vector<2x8x256xf32>
    %33 = arith.addf %26, %32 : vector<2x8x256xf32>
    %cst = arith.constant dense<0.000000e+00> : vector<2x8xf32>
    %34 = vector.multi_reduction <add>, %33, %cst [2] : vector<2x8x256xf32> to vector<2x8xf32>
    %35 = vector.shape_cast %34 : vector<2x8xf32> to vector<2x8x1xf32>
    %cst_9 = arith.constant dense<0.000000e+00> : vector<8x1xf32>
    %36 = vector.multi_reduction <add>, %35, %cst_9 [0] : vector<2x8x1xf32> to vector<8x1xf32>
    %37 = vector.shape_cast %36 : vector<8x1xf32> to vector<1x8x1xf32>
    %38 = arith.mulf %33, %33 : vector<2x8x256xf32>
    %cst_10 = arith.constant dense<0.000000e+00> : vector<2x8xf32>
    %39 = vector.multi_reduction <add>, %38, %cst_10 [2] : vector<2x8x256xf32> to vector<2x8xf32>
    %40 = vector.shape_cast %39 : vector<2x8xf32> to vector<2x8x1xf32>
    %cst_11 = arith.constant dense<0.000000e+00> : vector<8x1xf32>
    %41 = vector.multi_reduction <add>, %40, %cst_11 [0] : vector<2x8x1xf32> to vector<8x1xf32>
    %42 = vector.shape_cast %41 : vector<8x1xf32> to vector<1x8x1xf32>
    %cst_12 = arith.constant 0.001953125 : f32
    %43 = vector.broadcast %cst_12 : f32 to vector<1x8x1xf32>
    %44 = arith.mulf %37, %43 : vector<1x8x1xf32>
    %cst_13 = arith.constant 0.001953125 : f32
    %45 = vector.broadcast %cst_13 : f32 to vector<1x8x1xf32>
    %46 = arith.mulf %42, %45 : vector<1x8x1xf32>
    %47 = arith.mulf %44, %44 : vector<1x8x1xf32>
    %48 = arith.subf %46, %47 : vector<1x8x1xf32>
    %cst_14 = arith.constant 0.000000e+00 : f32
    %49 = vector.broadcast %cst_14 : f32 to vector<1x8x1xf32>
    %50 = arith.maximumf %48, %49 : vector<1x8x1xf32>
    %51 = vector.shape_cast %3 : vector<8x1xf32> to vector<1x8x1xf32>
    %cst_15 = arith.constant 9.99999974E-6 : f32
    %52 = vector.broadcast %cst_15 : f32 to vector<1x8x1xf32>
    %53 = arith.addf %50, %52 : vector<1x8x1xf32>
    %54 = math.rsqrt %53 : vector<1x8x1xf32>
    %55 = arith.mulf %51, %54 : vector<1x8x1xf32>
    %56 = vector.shape_cast %4 : vector<8x1xf32> to vector<1x8x1xf32>
    %57 = arith.mulf %44, %55 : vector<1x8x1xf32>
    %58 = arith.subf %56, %57 : vector<1x8x1xf32>
    %59 = vector.broadcast %55 : vector<1x8x1xf32> to vector<2x8x256xf32>
    %60 = arith.mulf %33, %59 : vector<2x8x256xf32>
    %61 = vector.broadcast %58 : vector<1x8x1xf32> to vector<2x8x256xf32>
    %62 = arith.addf %60, %61 : vector<2x8x256xf32>
    %cst_16 = arith.constant 0.000000e+00 : f32
    %63 = vector.broadcast %cst_16 : f32 to vector<2x8x256xf32>
    %64 = arith.maximumf %62, %63 : vector<2x8x256xf32>
    %65 = vector.extract_strided_slice %2 {offsets = [0, 0], sizes = [4, 1], strides = [1, 1]} : vector<4x8xf32> to vector<4x1xf32>
    %66 = vector.shape_cast %65 : vector<4x1xf32> to vector<1x4x1xf32>
    %67 = vector.extract_strided_slice %64 {offsets = [0, 0, 0], sizes = [2, 1, 256], strides = [1, 1, 1]} : vector<2x8x256xf32> to vector<2x1x256xf32>
    %68 = vector.broadcast %66 : vector<1x4x1xf32> to vector<2x4x256xf32>
    %69 = vector.broadcast %67 : vector<2x1x256xf32> to vector<2x4x256xf32>
    %70 = arith.mulf %68, %69 : vector<2x4x256xf32>
    %71 = vector.extract_strided_slice %2 {offsets = [0, 1], sizes = [4, 1], strides = [1, 1]} : vector<4x8xf32> to vector<4x1xf32>
    %72 = vector.shape_cast %71 : vector<4x1xf32> to vector<1x4x1xf32>
    %73 = vector.extract_strided_slice %64 {offsets = [0, 1, 0], sizes = [2, 1, 256], strides = [1, 1, 1]} : vector<2x8x256xf32> to vector<2x1x256xf32>
    %74 = vector.broadcast %72 : vector<1x4x1xf32> to vector<2x4x256xf32>
    %75 = vector.broadcast %73 : vector<2x1x256xf32> to vector<2x4x256xf32>
    %76 = arith.mulf %74, %75 : vector<2x4x256xf32>
    %77 = arith.addf %70, %76 : vector<2x4x256xf32>
    %78 = vector.extract_strided_slice %2 {offsets = [0, 2], sizes = [4, 1], strides = [1, 1]} : vector<4x8xf32> to vector<4x1xf32>
    %79 = vector.shape_cast %78 : vector<4x1xf32> to vector<1x4x1xf32>
    %80 = vector.extract_strided_slice %64 {offsets = [0, 2, 0], sizes = [2, 1, 256], strides = [1, 1, 1]} : vector<2x8x256xf32> to vector<2x1x256xf32>
    %81 = vector.broadcast %79 : vector<1x4x1xf32> to vector<2x4x256xf32>
    %82 = vector.broadcast %80 : vector<2x1x256xf32> to vector<2x4x256xf32>
    %83 = arith.mulf %81, %82 : vector<2x4x256xf32>
    %84 = arith.addf %77, %83 : vector<2x4x256xf32>
    %85 = vector.extract_strided_slice %2 {offsets = [0, 3], sizes = [4, 1], strides = [1, 1]} : vector<4x8xf32> to vector<4x1xf32>
    %86 = vector.shape_cast %85 : vector<4x1xf32> to vector<1x4x1xf32>
    %87 = vector.extract_strided_slice %64 {offsets = [0, 3, 0], sizes = [2, 1, 256], strides = [1, 1, 1]} : vector<2x8x256xf32> to vector<2x1x256xf32>
    %88 = vector.broadcast %86 : vector<1x4x1xf32> to vector<2x4x256xf32>
    %89 = vector.broadcast %87 : vector<2x1x256xf32> to vector<2x4x256xf32>
    %90 = arith.mulf %88, %89 : vector<2x4x256xf32>
    %91 = arith.addf %84, %90 : vector<2x4x256xf32>
    %92 = vector.extract_strided_slice %2 {offsets = [0, 4], sizes = [4, 1], strides = [1, 1]} : vector<4x8xf32> to vector<4x1xf32>
    %93 = vector.shape_cast %92 : vector<4x1xf32> to vector<1x4x1xf32>
    %94 = vector.extract_strided_slice %64 {offsets = [0, 4, 0], sizes = [2, 1, 256], strides = [1, 1, 1]} : vector<2x8x256xf32> to vector<2x1x256xf32>
    %95 = vector.broadcast %93 : vector<1x4x1xf32> to vector<2x4x256xf32>
    %96 = vector.broadcast %94 : vector<2x1x256xf32> to vector<2x4x256xf32>
    %97 = arith.mulf %95, %96 : vector<2x4x256xf32>
    %98 = arith.addf %91, %97 : vector<2x4x256xf32>
    %99 = vector.extract_strided_slice %2 {offsets = [0, 5], sizes = [4, 1], strides = [1, 1]} : vector<4x8xf32> to vector<4x1xf32>
    %100 = vector.shape_cast %99 : vector<4x1xf32> to vector<1x4x1xf32>
    %101 = vector.extract_strided_slice %64 {offsets = [0, 5, 0], sizes = [2, 1, 256], strides = [1, 1, 1]} : vector<2x8x256xf32> to vector<2x1x256xf32>
    %102 = vector.broadcast %100 : vector<1x4x1xf32> to vector<2x4x256xf32>
    %103 = vector.broadcast %101 : vector<2x1x256xf32> to vector<2x4x256xf32>
    %104 = arith.mulf %102, %103 : vector<2x4x256xf32>
    %105 = arith.addf %98, %104 : vector<2x4x256xf32>
    %106 = vector.extract_strided_slice %2 {offsets = [0, 6], sizes = [4, 1], strides = [1, 1]} : vector<4x8xf32> to vector<4x1xf32>
    %107 = vector.shape_cast %106 : vector<4x1xf32> to vector<1x4x1xf32>
    %108 = vector.extract_strided_slice %64 {offsets = [0, 6, 0], sizes = [2, 1, 256], strides = [1, 1, 1]} : vector<2x8x256xf32> to vector<2x1x256xf32>
    %109 = vector.broadcast %107 : vector<1x4x1xf32> to vector<2x4x256xf32>
    %110 = vector.broadcast %108 : vector<2x1x256xf32> to vector<2x4x256xf32>
    %111 = arith.mulf %109, %110 : vector<2x4x256xf32>
    %112 = arith.addf %105, %111 : vector<2x4x256xf32>
    %113 = vector.extract_strided_slice %2 {offsets = [0, 7], sizes = [4, 1], strides = [1, 1]} : vector<4x8xf32> to vector<4x1xf32>
    %114 = vector.shape_cast %113 : vector<4x1xf32> to vector<1x4x1xf32>
    %115 = vector.extract_strided_slice %64 {offsets = [0, 7, 0], sizes = [2, 1, 256], strides = [1, 1, 1]} : vector<2x8x256xf32> to vector<2x1x256xf32>
    %116 = vector.broadcast %114 : vector<1x4x1xf32> to vector<2x4x256xf32>
    %117 = vector.broadcast %115 : vector<2x1x256xf32> to vector<2x4x256xf32>
    %118 = arith.mulf %116, %117 : vector<2x4x256xf32>
    %119 = arith.addf %112, %118 : vector<2x4x256xf32>
    %cst_17 = arith.constant dense<0.000000e+00> : vector<2x4xf32>
    %120 = vector.multi_reduction <add>, %119, %cst_17 [2] : vector<2x4x256xf32> to vector<2x4xf32>
    %121 = vector.shape_cast %120 : vector<2x4xf32> to vector<2x4x1xf32>
    %cst_18 = arith.constant dense<0.000000e+00> : vector<4x1xf32>
    %122 = vector.multi_reduction <add>, %121, %cst_18 [0] : vector<2x4x1xf32> to vector<4x1xf32>
    %123 = vector.shape_cast %122 : vector<4x1xf32> to vector<1x4x1xf32>
    %124 = arith.mulf %119, %119 : vector<2x4x256xf32>
    %cst_19 = arith.constant dense<0.000000e+00> : vector<2x4xf32>
    %125 = vector.multi_reduction <add>, %124, %cst_19 [2] : vector<2x4x256xf32> to vector<2x4xf32>
    %126 = vector.shape_cast %125 : vector<2x4xf32> to vector<2x4x1xf32>
    %cst_20 = arith.constant dense<0.000000e+00> : vector<4x1xf32>
    %127 = vector.multi_reduction <add>, %126, %cst_20 [0] : vector<2x4x1xf32> to vector<4x1xf32>
    %128 = vector.shape_cast %127 : vector<4x1xf32> to vector<1x4x1xf32>
    %cst_21 = arith.constant 0.001953125 : f32
    %129 = vector.broadcast %cst_21 : f32 to vector<1x4x1xf32>
    %130 = arith.mulf %123, %129 : vector<1x4x1xf32>
    %cst_22 = arith.constant 0.001953125 : f32
    %131 = vector.broadcast %cst_22 : f32 to vector<1x4x1xf32>
    %132 = arith.mulf %128, %131 : vector<1x4x1xf32>
    %133 = arith.mulf %130, %130 : vector<1x4x1xf32>
    %134 = arith.subf %132, %133 : vector<1x4x1xf32>
    %cst_23 = arith.constant 0.000000e+00 : f32
    %135 = vector.broadcast %cst_23 : f32 to vector<1x4x1xf32>
    %136 = arith.maximumf %134, %135 : vector<1x4x1xf32>
    %137 = vector.shape_cast %5 : vector<4x1xf32> to vector<1x4x1xf32>
    %cst_24 = arith.constant 9.99999974E-6 : f32
    %138 = vector.broadcast %cst_24 : f32 to vector<1x4x1xf32>
    %139 = arith.addf %136, %138 : vector<1x4x1xf32>
    %140 = math.rsqrt %139 : vector<1x4x1xf32>
    %141 = arith.mulf %137, %140 : vector<1x4x1xf32>
    %142 = vector.shape_cast %6 : vector<4x1xf32> to vector<1x4x1xf32>
    %143 = arith.mulf %130, %141 : vector<1x4x1xf32>
    %144 = arith.subf %142, %143 : vector<1x4x1xf32>
    %145 = vector.broadcast %141 : vector<1x4x1xf32> to vector<2x4x256xf32>
    %146 = arith.mulf %119, %145 : vector<2x4x256xf32>
    %147 = vector.broadcast %144 : vector<1x4x1xf32> to vector<2x4x256xf32>
    %148 = arith.addf %146, %147 : vector<2x4x256xf32>
    %149 = arith.addf %148, %0 : vector<2x4x256xf32>
    %cst_25 = arith.constant 0.000000e+00 : f32
    %150 = vector.broadcast %cst_25 : f32 to vector<2x4x256xf32>
    %151 = arith.maximumf %149, %150 : vector<2x4x256xf32>
    %c0_26 = arith.constant 0 : index
    %c0_27 = arith.constant 0 : index
    %c0_28 = arith.constant 0 : index
    %152 = vector.load %arg2[%c0_26, %c0_27, %c0_28] : memref<2x4x256xf32, #tpu.memory_space<vmem>>, vector<2x4x256xf32>
    tpu.vector_store %arg2[%c0_26, %c0_27, %c0_28], %151 {strides = array<i32>} : memref<2x4x256xf32, #tpu.memory_space<vmem>>, vector<2x4x256xf32>,
    return
  }
}

</mosaic_0001>

<llo_original>
// kernel: tpu_custom_call.1
$region0: #{tpu_custom_call.1}
  #allocation0 [shape = 'u32[]', space=smem, size = 0x4, offset = 0x4, fixed_abs, tag = 'smem constant byte address 0x4 - core index']
  #allocation1 [shape = 'u32[144,128]{1,0:T(1,128)}', space=vmem, size = 0x12000, scoped, tag = 'internal scratch']
  %s0 = inlined_call_operand.hbm [shape: f32[2,4,256], index: 0, kind: input, shape index: {}]
  %s1 = inlined_call_operand.hbm [shape: f32[8,16], index: 1, kind: input, shape index: {}]
  %s2 = inlined_call_operand.hbm [shape: f32[2,4,256], index: 2, kind: output, shape index: {}]
  %s3 = sld [smem:[#allocation0]]
  $region26: #{tpu_custom_call.1} parent=0
    _
  %s5 = ssub.s32 1, %s3
  %s6 = scalar_select 0, %s5, %s3
  $region1: #{tpu_custom_call.1} parent=0
    #allocation2 [shape = 'u8[8192]{0}', space=vmem, size = 0x2000, scoped, tag = 'input window, operand 0, single buffered']
    #allocation3 [shape = 's32[1]{0}', space=sflag, size = 0x4, scoped, tag = 'scoped memory for tpu_custom_call.1']
    #allocation4 [shape = 's32[1]{0}', space=sflag, size = 0x4, scoped, tag = 'scoped memory for tpu_custom_call.1']
    #allocation5 [shape = 'u8[4096]{0}', space=vmem, size = 0x1000, scoped, tag = 'input window, operand 1, single buffered']
    #allocation6 [shape = 's32[1]{0}', space=sflag, size = 0x4, scoped, tag = 'scoped memory for tpu_custom_call.1']
    #allocation7 [shape = 'u8[8192]{0}', space=vmem, size = 0x2000, scoped, tag = 'output window, operand 0, single buffered']
    %7 = vsyncpa [#allocation3], 0
    %8 = vsyncpa [#allocation6], 0
    %9 = vsyncpa [#allocation4], 0
    // Predicated region
    $region2: #{tpu_custom_call.1} parent=1 // pred_check
      _
    $region3: #{tpu_custom_call.1} parent=1 // pred_check_branch
      %11 = sbr.rel (0) target = $region5
    $region4: #{tpu_custom_call.1} parent=1 // pred_region
      %s13 = ssub.s32 256, 256
      %14 = vsyncadd [#allocation3], %s13
      %s15 = sshll.u32 [#allocation2], 4
      %s16 = int_to_ptr.vmem [resolvable:$true] %s15
      %21 = dma.hbm_to_vmem [thread:$0]  %s0, 256, %s16, [#allocation3], 128, 128, 8
    $region5: #{tpu_custom_call.1} parent=1 // pred_fallthru
      _
    // Predicated region
    $region6: #{tpu_custom_call.1} parent=1 // pred_check
      _
    $region7: #{tpu_custom_call.1} parent=1 // pred_check_branch
      %23 = sbr.rel (0) target = $region9
    $region8: #{tpu_custom_call.1} parent=1 // pred_region
      %s25 = ssub.s32 128, 128
      %26 = vsyncadd [#allocation6], %s25
      %s28 = sshll.u32 [#allocation5], 4
      %s29 = int_to_ptr.vmem [resolvable:$true] %s28
      %31 = dma.hbm_to_vmem [thread:$0]  %s1, 128, %s29, [#allocation6]
    $region9: #{tpu_custom_call.1} parent=1 // pred_fallthru
      _
    // Predicated region
    $region10: #{tpu_custom_call.1} parent=1 // pred_check
      _
    $region11: #{tpu_custom_call.1} parent=1 // pred_check_branch
      %33 = sbr.rel (0) target = $region13
    $region12: #{tpu_custom_call.1} parent=1 // pred_region
      %34 = dma.done [#allocation3], 256
    $region13: #{tpu_custom_call.1} parent=1 // pred_fallthru
      _
    // Predicated region
    $region14: #{tpu_custom_call.1} parent=1 // pred_check
      _
    $region15: #{tpu_custom_call.1} parent=1 // pred_check_branch
      %36 = sbr.rel (0) target = $region17
    $region16: #{tpu_custom_call.1} parent=1 // pred_region
      %37 = dma.done [#allocation6], 128
    $region17: #{tpu_custom_call.1} parent=1 // pred_fallthru
      _
    %v38 = vld [vmem:[#allocation2] sm:$0xff]
    %v39 = vld [vmem:[#allocation2 + $0x8] sm:$0xff]
    %v40 = vld [vmem:[#allocation5] sm:$0xff]
    %v41 = vld [vmem:[#allocation5] sm:$0xf]
    %43 = vset.pattern.permute.xlu0 0
    %44 = vperm.xlu0 %43, %v40
    %v45 = vpop.permute.xlu0 %44
    %v49 = vlaneseq
    %v50 = vshrl.u32 %v49, 7
    %v51 = vsub.s32 0, %v50
    %v52 = vrot.slane %v38, %v51
    %v53 = vlaneseq
    %v54 = vshrl.u32 %v53, 7
    %v55 = vsub.s32 4, %v54
    %v56 = vrot.slane %v38, %v55
    %v57 = vlaneseq
    %v58 = vshrl.u32 %v57, 7
    %v59 = vsub.s32 0, %v58
    %v60 = vrot.slane %v39, %v59
    %v61 = vlaneseq
    %v62 = vshrl.u32 %v61, 7
    %v63 = vsub.s32 4, %v62
    %v64 = vrot.slane %v39, %v63
    %v69 = vlaneseq
    %v70 = vshrl.u32 %v69, 7
    %v71 = vsub.s32 0, %v70
    %v72 = vrot.slane %v52, %v71
    %v73 = vlaneseq
    %v74 = vshrl.u32 %v73, 7
    %v75 = vsub.s32 0, %v74
    %v76 = vrot.slane %v56, %v75
    %v77 = vlaneseq
    %v78 = vshrl.u32 %v77, 7
    %v79 = vsub.s32 0, %v78
    %v80 = vrot.slane %v60, %v79
    %v81 = vlaneseq
    %v82 = vshrl.u32 %v81, 7
    %v83 = vsub.s32 0, %v82
    %v84 = vrot.slane %v64, %v83
    %v85 = vmul.f32 %v45, %v72
    %v86 = vmul.f32 %v45, %v76
    %v87 = vmul.f32 %v45, %v80
    %v88 = vmul.f32 %v45, %v84
    %89 = vset.pattern.permute.xlu0 1
    %90 = vperm.xlu0 %89, %v40
    %v91 = vpop.permute.xlu0 %90
    %v93 = vlaneseq
    %v94 = vshrl.u32 %v93, 7
    %v95 = vsub.s32 1, %v94
    %v96 = vrot.slane %v38, %v95
    %v97 = vlaneseq
    %v98 = vshrl.u32 %v97, 7
    %v99 = vsub.s32 5, %v98
    %v100 = vrot.slane %v38, %v99
    %v101 = vlaneseq
    %v102 = vshrl.u32 %v101, 7
    %v103 = vsub.s32 1, %v102
    %v104 = vrot.slane %v39, %v103
    %v105 = vlaneseq
    %v106 = vshrl.u32 %v105, 7
    %v107 = vsub.s32 5, %v106
    %v108 = vrot.slane %v39, %v107
    %v113 = vlaneseq
    %v114 = vshrl.u32 %v113, 7
    %v115 = vsub.s32 1, %v114
    %v116 = vrot.slane %v96, %v115
    %v117 = vlaneseq
    %v118 = vshrl.u32 %v117, 7
    %v119 = vsub.s32 1, %v118
    %v120 = vrot.slane %v100, %v119
    %v121 = vlaneseq
    %v122 = vshrl.u32 %v121, 7
    %v123 = vsub.s32 1, %v122
    %v124 = vrot.slane %v104, %v123
    %v125 = vlaneseq
    %v126 = vshrl.u32 %v125, 7
    %v127 = vsub.s32 1, %v126
    %v128 = vrot.slane %v108, %v127
    %v129 = vmul.f32 %v91, %v116
    %v130 = vmul.f32 %v91, %v120
    %v131 = vmul.f32 %v91, %v124
    %v132 = vmul.f32 %v91, %v128
    %v133 = vadd.f32 %v85, %v129
    %v134 = vadd.f32 %v86, %v130
    %v135 = vadd.f32 %v87, %v131
    %v136 = vadd.f32 %v88, %v132
    %137 = vset.pattern.permute.xlu0 2
    %138 = vperm.xlu0 %137, %v40
    %v139 = vpop.permute.xlu0 %138
    %v141 = vlaneseq
    %v142 = vshrl.u32 %v141, 7
    %v143 = vsub.s32 2, %v142
    %v144 = vrot.slane %v38, %v143
    %v145 = vlaneseq
    %v146 = vshrl.u32 %v145, 7
    %v147 = vsub.s32 6, %v146
    %v148 = vrot.slane %v38, %v147
    %v149 = vlaneseq
    %v150 = vshrl.u32 %v149, 7
    %v151 = vsub.s32 2, %v150
    %v152 = vrot.slane %v39, %v151
    %v153 = vlaneseq
    %v154 = vshrl.u32 %v153, 7
    %v155 = vsub.s32 6, %v154
    %v156 = vrot.slane %v39, %v155
    %v161 = vlaneseq
    %v162 = vshrl.u32 %v161, 7
    %v163 = vsub.s32 2, %v162
    %v164 = vrot.slane %v144, %v163
    %v165 = vlaneseq
    %v166 = vshrl.u32 %v165, 7
    %v167 = vsub.s32 2, %v166
    %v168 = vrot.slane %v148, %v167
    %v169 = vlaneseq
    %v170 = vshrl.u32 %v169, 7
    %v171 = vsub.s32 2, %v170
    %v172 = vrot.slane %v152, %v171
    %v173 = vlaneseq
    %v174 = vshrl.u32 %v173, 7
    %v175 = vsub.s32 2, %v174
    %v176 = vrot.slane %v156, %v175
    %v177 = vmul.f32 %v139, %v164
    %v178 = vmul.f32 %v139, %v168
    %v179 = vmul.f32 %v139, %v172
    %v180 = vmul.f32 %v139, %v176
    %v181 = vadd.f32 %v133, %v177
    %v182 = vadd.f32 %v134, %v178
    %v183 = vadd.f32 %v135, %v179
    %v184 = vadd.f32 %v136, %v180
    %185 = vset.pattern.permute.xlu0 3
    %186 = vperm.xlu0 %185, %v40
    %v187 = vpop.permute.xlu0 %186
    %v189 = vlaneseq
    %v190 = vshrl.u32 %v189, 7
    %v191 = vsub.s32 3, %v190
    %v192 = vrot.slane %v38, %v191
    %v193 = vlaneseq
    %v194 = vshrl.u32 %v193, 7
    %v195 = vsub.s32 7, %v194
    %v196 = vrot.slane %v38, %v195
    %v197 = vlaneseq
    %v198 = vshrl.u32 %v197, 7
    %v199 = vsub.s32 3, %v198
    %v200 = vrot.slane %v39, %v199
    %v201 = vlaneseq
    %v202 = vshrl.u32 %v201, 7
    %v203 = vsub.s32 7, %v202
    %v204 = vrot.slane %v39, %v203
    %v209 = vlaneseq
    %v210 = vshrl.u32 %v209, 7
    %v211 = vsub.s32 3, %v210
    %v212 = vrot.slane %v192, %v211
    %v213 = vlaneseq
    %v214 = vshrl.u32 %v213, 7
    %v215 = vsub.s32 3, %v214
    %v216 = vrot.slane %v196, %v215
    %v217 = vlaneseq
    %v218 = vshrl.u32 %v217, 7
    %v219 = vsub.s32 3, %v218
    %v220 = vrot.slane %v200, %v219
    %v221 = vlaneseq
    %v222 = vshrl.u32 %v221, 7
    %v223 = vsub.s32 3, %v222
    %v224 = vrot.slane %v204, %v223
    %v225 = vmul.f32 %v187, %v212
    %v226 = vmul.f32 %v187, %v216
    %v227 = vmul.f32 %v187, %v220
    %v228 = vmul.f32 %v187, %v224
    %v229 = vadd.f32 %v181, %v225
    %v230 = vadd.f32 %v182, %v226
    %v231 = vadd.f32 %v183, %v227
    %v232 = vadd.f32 %v184, %v228
    %v233 = vadd.f32 %v229, %v230
    %234 = vadd.xlane.f32.xlu0 %v233
    %v235 = vpop.xlane.xlu0 %234
    %v236 = vadd.f32 %v231, %v232
    %237 = vadd.xlane.f32.xlu0 %v236
    %v238 = vpop.xlane.xlu0 %237
    %v239 = vadd.f32 %v235, %v238
    %v240 = vmul.f32 %v229, %v229
    %v241 = vmul.f32 %v230, %v230
    %v242 = vmul.f32 %v231, %v231
    %v243 = vmul.f32 %v232, %v232
    %v244 = vadd.f32 %v240, %v241
    %245 = vadd.xlane.f32.xlu0 %v244
    %v246 = vpop.xlane.xlu0 %245
    %v247 = vadd.f32 %v242, %v243
    %248 = vadd.xlane.f32.xlu0 %v247
    %v249 = vpop.xlane.xlu0 %248
    %v250 = vadd.f32 %v246, %v249
    %v251 = vmul.f32 %v239, 0.001953125
    %v252 = vmul.f32 %v250, 0.001953125
    %v253 = vmul.f32 %v251, %v251
    %v254 = vsub.f32 %v252, %v253
    %v255 = vmax.f32 %v254, 0.0
    %v256 = vadd.f32 %v255, 1e-05
    %v257 = vrsqrt.pop %v256
    %v258 = vmul.f32 %v40, %v257
    %v259 = vmul.f32 %v251, %v258
    %261 = vrot.lane.b32.xlu0 %v259, 1
    %v262 = vpop.permute.xlu0 %261
    %v264 = vsub.f32 %v40, %v262
    %266 = vset.pattern.permute.xlu0 12
    %267 = vperm.xlu0 %266, %v258
    %v268 = vpop.permute.xlu0 %267
    %v270 = vmul.f32 %v229, %v268
    %v271 = vmul.f32 %v230, %v268
    %v272 = vmul.f32 %v231, %v268
    %v273 = vmul.f32 %v232, %v268
    %275 = vset.pattern.permute.xlu0 13
    %276 = vperm.xlu0 %275, %v264
    %v277 = vpop.permute.xlu0 %276
    %v279 = vadd.f32 %v270, %v277
    %v280 = vadd.f32 %v271, %v277
    %v281 = vadd.f32 %v272, %v277
    %v282 = vadd.f32 %v273, %v277
    %v283 = vmax.f32 %v279, 0.0
    %v284 = vmax.f32 %v280, 0.0
    %v285 = vmax.f32 %v281, 0.0
    %v286 = vmax.f32 %v282, 0.0
    %288 = vset.pattern.permute.xlu0 4
    %289 = vperm.xlu0 %288, %v41
    %v290 = vpop.permute.xlu0 %289
    %v292 = vlaneseq
    %v293 = vshrl.u32 %v292, 7
    %v294 = vsub.s32 0, %v293
    %v295 = vrot.slane %v283, %v294
    %v296 = vlaneseq
    %v297 = vshrl.u32 %v296, 7
    %v298 = vsub.s32 0, %v297
    %v299 = vrot.slane %v284, %v298
    %v300 = vlaneseq
    %v301 = vshrl.u32 %v300, 7
    %v302 = vsub.s32 0, %v301
    %v303 = vrot.slane %v285, %v302
    %v304 = vlaneseq
    %v305 = vshrl.u32 %v304, 7
    %v306 = vsub.s32 0, %v305
    %v307 = vrot.slane %v286, %v306
    %v308 = vmul.f32 %v290, %v295
    %v309 = vmul.f32 %v290, %v299
    %v310 = vmul.f32 %v290, %v303
    %v311 = vmul.f32 %v290, %v307
    %312 = vset.pattern.permute.xlu0 5
    %313 = vperm.xlu0 %312, %v41
    %v314 = vpop.permute.xlu0 %313
    %v316 = vlaneseq
    %v317 = vshrl.u32 %v316, 7
    %v318 = vsub.s32 1, %v317
    %v319 = vrot.slane %v283, %v318
    %v320 = vlaneseq
    %v321 = vshrl.u32 %v320, 7
    %v322 = vsub.s32 1, %v321
    %v323 = vrot.slane %v284, %v322
    %v324 = vlaneseq
    %v325 = vshrl.u32 %v324, 7
    %v326 = vsub.s32 1, %v325
    %v327 = vrot.slane %v285, %v326
    %v328 = vlaneseq
    %v329 = vshrl.u32 %v328, 7
    %v330 = vsub.s32 1, %v329
    %v331 = vrot.slane %v286, %v330
    %v332 = vmul.f32 %v314, %v319
    %v333 = vmul.f32 %v314, %v323
    %v334 = vmul.f32 %v314, %v327
    %v335 = vmul.f32 %v314, %v331
    %v336 = vadd.f32 %v308, %v332
    %v337 = vadd.f32 %v309, %v333
    %v338 = vadd.f32 %v310, %v334
    %v339 = vadd.f32 %v311, %v335
    %340 = vset.pattern.permute.xlu0 6
    %341 = vperm.xlu0 %340, %v41
    %v342 = vpop.permute.xlu0 %341
    %v344 = vlaneseq
    %v345 = vshrl.u32 %v344, 7
    %v346 = vsub.s32 2, %v345
    %v347 = vrot.slane %v283, %v346
    %v348 = vlaneseq
    %v349 = vshrl.u32 %v348, 7
    %v350 = vsub.s32 2, %v349
    %v351 = vrot.slane %v284, %v350
    %v352 = vlaneseq
    %v353 = vshrl.u32 %v352, 7
    %v354 = vsub.s32 2, %v353
    %v355 = vrot.slane %v285, %v354
    %v356 = vlaneseq
    %v357 = vshrl.u32 %v356, 7
    %v358 = vsub.s32 2, %v357
    %v359 = vrot.slane %v286, %v358
    %v360 = vmul.f32 %v342, %v347
    %v361 = vmul.f32 %v342, %v351
    %v362 = vmul.f32 %v342, %v355
    %v363 = vmul.f32 %v342, %v359
    %v364 = vadd.f32 %v336, %v360
    %v365 = vadd.f32 %v337, %v361
    %v366 = vadd.f32 %v338, %v362
    %v367 = vadd.f32 %v339, %v363
    %368 = vset.pattern.permute.xlu0 7
    %369 = vperm.xlu0 %368, %v41
    %v370 = vpop.permute.xlu0 %369
    %v372 = vlaneseq
    %v373 = vshrl.u32 %v372, 7
    %v374 = vsub.s32 3, %v373
    %v375 = vrot.slane %v283, %v374
    %v376 = vlaneseq
    %v377 = vshrl.u32 %v376, 7
    %v378 = vsub.s32 3, %v377
    %v379 = vrot.slane %v284, %v378
    %v380 = vlaneseq
    %v381 = vshrl.u32 %v380, 7
    %v382 = vsub.s32 3, %v381
    %v383 = vrot.slane %v285, %v382
    %v384 = vlaneseq
    %v385 = vshrl.u32 %v384, 7
    %v386 = vsub.s32 3, %v385
    %v387 = vrot.slane %v286, %v386
    %v388 = vmul.f32 %v370, %v375
    %v389 = vmul.f32 %v370, %v379
    %v390 = vmul.f32 %v370, %v383
    %v391 = vmul.f32 %v370, %v387
    %v392 = vadd.f32 %v364, %v388
    %v393 = vadd.f32 %v365, %v389
    %v394 = vadd.f32 %v366, %v390
    %v395 = vadd.f32 %v367, %v391
    %396 = vset.pattern.permute.xlu0 8
    %397 = vperm.xlu0 %396, %v41
    %v398 = vpop.permute.xlu0 %397
    %v400 = vlaneseq
    %v401 = vshrl.u32 %v400, 7
    %v402 = vsub.s32 4, %v401
    %v403 = vrot.slane %v283, %v402
    %v404 = vlaneseq
    %v405 = vshrl.u32 %v404, 7
    %v406 = vsub.s32 4, %v405
    %v407 = vrot.slane %v284, %v406
    %v408 = vlaneseq
    %v409 = vshrl.u32 %v408, 7
    %v410 = vsub.s32 4, %v409
    %v411 = vrot.slane %v285, %v410
    %v412 = vlaneseq
    %v413 = vshrl.u32 %v412, 7
    %v414 = vsub.s32 4, %v413
    %v415 = vrot.slane %v286, %v414
    %v416 = vmul.f32 %v398, %v403
    %v417 = vmul.f32 %v398, %v407
    %v418 = vmul.f32 %v398, %v411
    %v419 = vmul.f32 %v398, %v415
    %v420 = vadd.f32 %v392, %v416
    %v421 = vadd.f32 %v393, %v417
    %v422 = vadd.f32 %v394, %v418
    %v423 = vadd.f32 %v395, %v419
    %424 = vset.pattern.permute.xlu0 9
    %425 = vperm.xlu0 %424, %v41
    %v426 = vpop.permute.xlu0 %425
    %v428 = vlaneseq
    %v429 = vshrl.u32 %v428, 7
    %v430 = vsub.s32 5, %v429
    %v431 = vrot.slane %v283, %v430
    %v432 = vlaneseq
    %v433 = vshrl.u32 %v432, 7
    %v434 = vsub.s32 5, %v433
    %v435 = vrot.slane %v284, %v434
    %v436 = vlaneseq
    %v437 = vshrl.u32 %v436, 7
    %v438 = vsub.s32 5, %v437
    %v439 = vrot.slane %v285, %v438
    %v440 = vlaneseq
    %v441 = vshrl.u32 %v440, 7
    %v442 = vsub.s32 5, %v441
    %v443 = vrot.slane %v286, %v442
    %v444 = vmul.f32 %v426, %v431
    %v445 = vmul.f32 %v426, %v435
    %v446 = vmul.f32 %v426, %v439
    %v447 = vmul.f32 %v426, %v443
    %v448 = vadd.f32 %v420, %v444
    %v449 = vadd.f32 %v421, %v445
    %v450 = vadd.f32 %v422, %v446
    %v451 = vadd.f32 %v423, %v447
    %452 = vset.pattern.permute.xlu0 10
    %453 = vperm.xlu0 %452, %v41
    %v454 = vpop.permute.xlu0 %453
    %v456 = vlaneseq
    %v457 = vshrl.u32 %v456, 7
    %v458 = vsub.s32 6, %v457
    %v459 = vrot.slane %v283, %v458
    %v460 = vlaneseq
    %v461 = vshrl.u32 %v460, 7
    %v462 = vsub.s32 6, %v461
    %v463 = vrot.slane %v284, %v462
    %v464 = vlaneseq
    %v465 = vshrl.u32 %v464, 7
    %v466 = vsub.s32 6, %v465
    %v467 = vrot.slane %v285, %v466
    %v468 = vlaneseq
    %v469 = vshrl.u32 %v468, 7
    %v470 = vsub.s32 6, %v469
    %v471 = vrot.slane %v286, %v470
    %v472 = vmul.f32 %v454, %v459
    %v473 = vmul.f32 %v454, %v463
    %v474 = vmul.f32 %v454, %v467
    %v475 = vmul.f32 %v454, %v471
    %v476 = vadd.f32 %v448, %v472
    %v477 = vadd.f32 %v449, %v473
    %v478 = vadd.f32 %v450, %v474
    %v479 = vadd.f32 %v451, %v475
    %480 = vset.pattern.permute.xlu0 11
    %481 = vperm.xlu0 %480, %v41
    %v482 = vpop.permute.xlu0 %481
    %v484 = vlaneseq
    %v485 = vshrl.u32 %v484, 7
    %v486 = vsub.s32 7, %v485
    %v487 = vrot.slane %v283, %v486
    %v488 = vlaneseq
    %v489 = vshrl.u32 %v488, 7
    %v490 = vsub.s32 7, %v489
    %v491 = vrot.slane %v284, %v490
    %v492 = vlaneseq
    %v493 = vshrl.u32 %v492, 7
    %v494 = vsub.s32 7, %v493
    %v495 = vrot.slane %v285, %v494
    %v496 = vlaneseq
    %v497 = vshrl.u32 %v496, 7
    %v498 = vsub.s32 7, %v497
    %v499 = vrot.slane %v286, %v498
    %v500 = vmul.f32 %v482, %v487
    %v501 = vmul.f32 %v482, %v491
    %v502 = vmul.f32 %v482, %v495
    %v503 = vmul.f32 %v482, %v499
    %v504 = vadd.f32 %v476, %v500
    %v505 = vadd.f32 %v477, %v501
    %v506 = vadd.f32 %v478, %v502
    %v507 = vadd.f32 %v479, %v503
    %vm508 = vcmask 1043456
    %v509 = vsel %vm508, %v504, 0.0
    %v510 = vsel %vm508, %v505, 0.0
    %v511 = vadd.f32 %v509, %v510
    %512 = vadd.xlane.f32.xlu0 %v511
    %v513 = vpop.xlane.xlu0 %512
    %v514 = vsel %vm508, %v506, 0.0
    %v515 = vsel %vm508, %v507, 0.0
    %v516 = vadd.f32 %v514, %v515
    %517 = vadd.xlane.f32.xlu0 %v516
    %v518 = vpop.xlane.xlu0 %517
    %v519 = vsel %vm508, %v513, 0.0
    %v520 = vsel %vm508, %v518, 0.0
    %v521 = vadd.f32 %v519, %v520
    %v522 = vmul.f32 %v504, %v504
    %v523 = vmul.f32 %v505, %v505
    %v524 = vmul.f32 %v506, %v506
    %v525 = vmul.f32 %v507, %v507
    %v526 = vsel %vm508, %v522, 0.0
    %v527 = vsel %vm508, %v523, 0.0
    %v528 = vadd.f32 %v526, %v527
    %529 = vadd.xlane.f32.xlu0 %v528
    %v530 = vpop.xlane.xlu0 %529
    %v531 = vsel %vm508, %v524, 0.0
    %v532 = vsel %vm508, %v525, 0.0
    %v533 = vadd.f32 %v531, %v532
    %534 = vadd.xlane.f32.xlu0 %v533
    %v535 = vpop.xlane.xlu0 %534
    %v536 = vsel %vm508, %v530, 0.0
    %v537 = vsel %vm508, %v535, 0.0
    %v538 = vadd.f32 %v536, %v537
    %v539 = vmul.f32 %v521, 0.001953125
    %v540 = vmul.f32 %v538, 0.001953125
    %v541 = vmul.f32 %v539, %v539
    %v542 = vsub.f32 %v540, %v541
    %v543 = vmax.f32 %v542, 0.0
    %v544 = vadd.f32 %v543, 1e-05
    %v545 = vrsqrt.pop %v544
    %v546 = vmul.f32 %v41, %v545
    %v547 = vmul.f32 %v539, %v546
    %549 = vrot.lane.b32.xlu0 %v547, 1
    %v550 = vpop.permute.xlu0 %549
    %v552 = vsub.f32 %v41, %v550
    %554 = vset.pattern.permute.xlu0 14
    %555 = vperm.xlu0 %554, %v546
    %v556 = vpop.permute.xlu0 %555
    %v558 = vmul.f32 %v504, %v556
    %v559 = vmul.f32 %v505, %v556
    %v560 = vmul.f32 %v506, %v556
    %v561 = vmul.f32 %v507, %v556
    %563 = vset.pattern.permute.xlu0 15
    %564 = vperm.xlu0 %563, %v552
    %v565 = vpop.permute.xlu0 %564
    %v567 = vadd.f32 %v558, %v565
    %v568 = vadd.f32 %v559, %v565
    %v569 = vadd.f32 %v560, %v565
    %v570 = vadd.f32 %v561, %v565
    %v571 = vcombine.high %v38, %v38
    %v572 = vcombine.high %v39, %v39
    %v575 = vadd.f32 %v567, %v38
    %v576 = vadd.f32 %v568, %v571
    %v577 = vadd.f32 %v569, %v39
    %v578 = vadd.f32 %v570, %v572
    %v579 = vmax.f32 %v575, 0.0
    %v580 = vmax.f32 %v576, 0.0
    %v581 = vmax.f32 %v577, 0.0
    %v582 = vmax.f32 %v578, 0.0
    %v587 = vcombine.low %v579, %v580
    %v588 = vcombine.low %v581, %v582
    %591 = vst [vmem:[#allocation7] sm:$0xff] %v587
    %592 = vst [vmem:[#allocation7 + $0x8] sm:$0xff] %v588
    // Predicated region
    $region18: #{tpu_custom_call.1} parent=1 // pred_check
      _
    $region19: #{tpu_custom_call.1} parent=1 // pred_check_branch
      %594 = sbr.rel (0) target = $region21
    $region20: #{tpu_custom_call.1} parent=1 // pred_region
      %s596 = ssub.s32 256, 256
      %597 = vsyncadd [#allocation4], %s596
      %s598 = sshll.u32 [#allocation7], 4
      %s599 = int_to_ptr.vmem [resolvable:$true] %s598
      %604 = dma.vmem_to_hbm [thread:$0]  %s599, 256, %s2, [#allocation4], 128, 128, 8
    $region21: #{tpu_custom_call.1} parent=1 // pred_fallthru
      _
    // Predicated region
    $region22: #{tpu_custom_call.1} parent=1 // pred_check
      _
    $region23: #{tpu_custom_call.1} parent=1 // pred_check_branch
      %606 = sbr.rel (0) target = $region25
    $region24: #{tpu_custom_call.1} parent=1 // pred_region
      %607 = dma.done [#allocation4], 256
    $region25: #{tpu_custom_call.1} parent=1 // pred_fallthru
      _
    %608 = vsyncpa [#allocation3], 1
    %609 = vsyncpa [#allocation6], 1
    %610 = vsyncpa [#allocation4], 1

</llo_original>
